<compile_context>
chip_gen: v7x
topology: tpu7x:2x2x1
jax: 0.10.0
libtpu: 0.0.40
codegen_flags: <defaults>
</compile_context>

<pallas_src>
import jax
import jax.numpy as jnp
from jax.experimental import pallas as pl
from jax.experimental.pallas import tpu as pltpu


def basic_block_kernel(x_ref, w1_ref, b1_ref, g1_ref, be1_ref,
                       w2_ref, b2_ref, g2_ref, be2_ref,
                       o_ref, h_ref):
    """All refs in VMEM, PyTorch NCL layout (L = lane axis).

    x_ref          : (N, C, L)      input, f32
    w1_ref, w2_ref : (Cout, 3*Cin)  conv taps, tap-major column blocks
    b*/g*/be*_ref  : (C, 1)         conv bias / BN gamma / BN beta
    o_ref          : (N, C, L)      output
    h_ref          : (N, C, L)      scratch (conv1 out -> bn1+relu out)
    """
    N, C, L = x_ref.shape
    eps = jnp.float32(1e-5)
    inv_count = jnp.float32(1.0 / (N * L))

    def conv_with_stats(src_ref, w_ref, b_ref, dst_ref):
        """k=3, pad=1, stride=1 conv; also accumulates per-channel sum/sumsq."""
        w = w_ref[...]                     # (Cout, 3*Cin)
        b = b_ref[...]                     # (Cout, 1)
        cout = w.shape[0]
        s = jnp.zeros((cout, 1), jnp.float32)
        ss = jnp.zeros((cout, 1), jnp.float32)
        # TODO(synk): for large N fold the batch into the matmul / a grid axis.
        for n in range(N):
            v = src_ref[n]                 # (Cin, L)
            lane = jax.lax.broadcasted_iota(jnp.int32, v.shape, 1)
            # tap k=0 uses x[l-1]; tap k=2 uses x[l+1]; zero-padded boundaries.
            vm1 = jnp.where(lane == 0, 0.0, pltpu.roll(v, shift=1, axis=1))
            vp1 = jnp.where(lane == L - 1, 0.0,
                            pltpu.roll(v, shift=L - 1, axis=1))
            xcat = jnp.concatenate([vm1, v, vp1], axis=0)    # (3*Cin, L)
            y = jnp.dot(w, xcat, preferred_element_type=jnp.float32) + b
            dst_ref[n] = y
            s = s + jnp.sum(y, axis=1, keepdims=True)
            ss = ss + jnp.sum(y * y, axis=1, keepdims=True)
        return s, ss

    def bn_affine(s, ss, g_ref, be_ref):
        """Fold training-mode BN into a single per-channel scale & shift."""
        mu = s * inv_count                                      # (C, 1)
        rstd = jax.lax.rsqrt(ss * inv_count - mu * mu + eps)    # (C, 1)
        scale = g_ref[...] * rstd
        shift = be_ref[...] - scale * mu
        return scale[None], shift[None]                         # (1, C, 1)

    # conv1 -> h, then bn1 + relu in place on h.
    s1, ss1 = conv_with_stats(x_ref, w1_ref, b1_ref, h_ref)
    scale1, shift1 = bn_affine(s1, ss1, g1_ref, be1_ref)
    h_ref[...] = jnp.maximum(h_ref[...] * scale1 + shift1, 0.0)

    # conv2 -> o, then bn2 + residual + relu in place on o.
    s2, ss2 = conv_with_stats(h_ref, w2_ref, b2_ref, o_ref)
    scale2, shift2 = bn_affine(s2, ss2, g2_ref, be2_ref)
    o_ref[...] = jnp.maximum(o_ref[...] * scale2 + shift2 + x_ref[...], 0.0)


@jax.jit
def basic_block_forward(x_ncl, w1, b1, g1, be1, w2, b2, g2, be2):
    """x_ncl: (N, C, L) PyTorch layout; conv weights in PyTorch (Cout, Cin, 3)."""
    N, C, L = x_ncl.shape

    def tap_major(w):   # (Cout, Cin, 3) -> (Cout, 3*Cin), tap-major column blocks
        w = w.astype(jnp.float32)
        return jnp.concatenate([w[:, :, 0], w[:, :, 1], w[:, :, 2]], axis=1)

    col = lambda v: v.reshape(-1, 1).astype(jnp.float32)

    vmem = pl.BlockSpec(memory_space=pltpu.MemorySpace.VMEM)
    return pl.pallas_call(
        basic_block_kernel,
        out_shape=jax.ShapeDtypeStruct((N, C, L), jnp.float32),
        in_specs=[vmem] * 9,
        out_specs=vmem,
        scratch_shapes=[pltpu.VMEM((N, C, L), jnp.float32)],
        compiler_params=pltpu.CompilerParams(
            vmem_limit_bytes=32 * 1024 * 1024),
    )(x_ncl.astype(jnp.float32),
      tap_major(w1), col(b1), col(g1), col(be1),
      tap_major(w2), col(b2), col(g2), col(be2))


def _reference_forward(x_ncl, w1, b1, g1, be1, w2, b2, g2, be2):
    """Pure-JAX reference mirroring the PyTorch module (training-mode BN)."""
    def conv1d(x, w, b):
        y = jax.lax.conv_general_dilated(
            x, w, window_strides=(1,), padding=((1, 1),),
            dimension_numbers=("NCH", "OIH", "NCH"))
        return y + b[None, :, None]

    def bn(x, g, be):
        mu = jnp.mean(x, axis=(0, 2), keepdims=True)
        var = jnp.mean((x - mu) ** 2, axis=(0, 2), keepdims=True)
        return g[None, :, None] * (x - mu) / jnp.sqrt(var + 1e-5) + be[None, :, None]

    h = jax.nn.relu(bn(conv1d(x_ncl, w1, b1), g1, be1))
    h = bn(conv1d(h, w2, b2), g2, be2)
    return jax.nn.relu(h + x_ncl)


if __name__ == "__main__":
    N, C, L = 2, 4, 16   # batch, channels (inplanes == outplanes), sequence length
    key = jax.random.PRNGKey(0)
    ks = jax.random.split(key, 9)

    x = jax.random.normal(ks[0], (N, C, L), jnp.float32)
    # Conv weights in PyTorch layout (Cout, Cin, 3); BN params deterministic.
    w1 = 0.2 * jax.random.normal(ks[1], (C, C, 3), jnp.float32)
    b1 = 0.1 * jax.random.normal(ks[2], (C,), jnp.float32)
    g1 = 1.0 + 0.1 * jax.random.normal(ks[3], (C,), jnp.float32)
    be1 = 0.1 * jax.random.normal(ks[4], (C,), jnp.float32)
    w2 = 0.2 * jax.random.normal(ks[5], (C, C, 3), jnp.float32)
    b2 = 0.1 * jax.random.normal(ks[6], (C,), jnp.float32)
    g2 = 1.0 + 0.1 * jax.random.normal(ks[7], (C,), jnp.float32)
    be2 = 0.1 * jax.random.normal(ks[8], (C,), jnp.float32)

    out = basic_block_forward(x, w1, b1, g1, be1, w2, b2, g2, be2)
    out = jax.block_until_ready(out)

    ref = _reference_forward(x, w1, b1, g1, be1, w2, b2, g2, be2)
    assert out.shape == (N, C, L), out.shape
    err = float(jnp.max(jnp.abs(out - ref)))
    assert jnp.allclose(out, ref, rtol=1e-4, atol=1e-4), err

    print("KERNEL_OK")
</pallas_src>

<mosaic_0001>
module attributes {stable_mosaic.version = 11 : i64} {
  func.func @basic_block_kernel(%arg0: memref<2x4x16xf32, #tpu.memory_space<vmem>>, %arg1: memref<4x12xf32, #tpu.memory_space<vmem>>, %arg2: memref<4x1xf32, #tpu.memory_space<vmem>>, %arg3: memref<4x1xf32, #tpu.memory_space<vmem>>, %arg4: memref<4x1xf32, #tpu.memory_space<vmem>>, %arg5: memref<4x12xf32, #tpu.memory_space<vmem>>, %arg6: memref<4x1xf32, #tpu.memory_space<vmem>>, %arg7: memref<4x1xf32, #tpu.memory_space<vmem>>, %arg8: memref<4x1xf32, #tpu.memory_space<vmem>>, %arg9: memref<2x4x16xf32, #tpu.memory_space<vmem>>, %arg10: memref<2x4x16xf32, #tpu.memory_space<vmem>>) attributes {dimension_semantics = [], scalar_prefetch = 0 : i64, scratch_operands = 1 : i64, tpu.core_type = #tpu.core_type<tc>} {
    %c0 = arith.constant 0 : index
    %c0_0 = arith.constant 0 : index
    %0 = vector.load %arg1[%c0, %c0_0] : memref<4x12xf32, #tpu.memory_space<vmem>>, vector<4x12xf32>
    %c0_1 = arith.constant 0 : index
    %c0_2 = arith.constant 0 : index
    %1 = vector.load %arg2[%c0_1, %c0_2] : memref<4x1xf32, #tpu.memory_space<vmem>>, vector<4x1xf32>
    %cst = arith.constant 0.000000e+00 : f32
    %2 = vector.broadcast %cst : f32 to vector<4x1xf32>
    %cst_3 = arith.constant 0.000000e+00 : f32
    %3 = vector.broadcast %cst_3 : f32 to vector<4x1xf32>
    %c0_4 = arith.constant 0 : index
    %c0_5 = arith.constant 0 : index
    %c0_6 = arith.constant 0 : index
    %4 = vector.load %arg0[%c0_4, %c0_5, %c0_6] : memref<2x4x16xf32, #tpu.memory_space<vmem>>, vector<1x4x16xf32>
    %5 = vector.shape_cast %4 : vector<1x4x16xf32> to vector<4x16xf32>
    %6 = tpu.iota {dimensions = array<i32: 1>} : vector<4x16xi32>
    %c0_i32 = arith.constant 0 : i32
    %7 = vector.broadcast %c0_i32 : i32 to vector<4x16xi32>
    %8 = arith.cmpi eq, %6, %7 : vector<4x16xi32>
    %c1_i32 = arith.constant 1 : i32
    %9 = tpu.dynamic_rotate %5 by %c1_i32 dim 1 : vector<4x16xf32>, i32 -> vector<4x16xf32>
    %cst_7 = arith.constant 0.000000e+00 : f32
    %10 = vector.broadcast %cst_7 : f32 to vector<4x16xf32>
    %11 = arith.select %8, %10, %9 : vector<4x16xi1>, vector<4x16xf32>
    %c15_i32 = arith.constant 15 : i32
    %12 = vector.broadcast %c15_i32 : i32 to vector<4x16xi32>
    %13 = arith.cmpi eq, %6, %12 : vector<4x16xi32>
    %c15_i32_8 = arith.constant 15 : i32
    %14 = tpu.dynamic_rotate %5 by %c15_i32_8 dim 1 : vector<4x16xf32>, i32 -> vector<4x16xf32>
    %cst_9 = arith.constant 0.000000e+00 : f32
    %15 = vector.broadcast %cst_9 : f32 to vector<4x16xf32>
    %16 = arith.select %13, %15, %14 : vector<4x16xi1>, vector<4x16xf32>
    %17 = tpu.concatenate %11, %5, %16 in 0 : vector<4x16xf32>, vector<4x16xf32>, vector<4x16xf32> -> vector<12x16xf32>
    %cst_10 = arith.constant dense<0.000000e+00> : vector<4x16xf32>
    %18 = tpu.matmul %0, %17, %cst_10 {dimension_numbers = #tpu.dot_dimension_numbers<[1], [0], [0], [1], [0, 0, 1, 1], [], []>} : vector<4x12xf32>, vector<12x16xf32>, vector<4x16xf32> -> vector<4x16xf32>
    %19 = vector.broadcast %1 : vector<4x1xf32> to vector<4x16xf32>
    %20 = arith.addf %18, %19 : vector<4x16xf32>
    %c0_11 = arith.constant 0 : index
    %c0_12 = arith.constant 0 : index
    %c0_13 = arith.constant 0 : index
    %21 = vector.load %arg10[%c0_11, %c0_12, %c0_13] : memref<2x4x16xf32, #tpu.memory_space<vmem>>, vector<1x4x16xf32>
    %22 = vector.shape_cast %21 : vector<1x4x16xf32> to vector<4x16xf32>
    %23 = vector.shape_cast %20 : vector<4x16xf32> to vector<1x4x16xf32>
    tpu.vector_store %arg10[%c0_11, %c0_12, %c0_13], %23 {strides = array<i32>} : memref<2x4x16xf32, #tpu.memory_space<vmem>>, vector<1x4x16xf32>,
    %cst_14 = arith.constant dense<0.000000e+00> : vector<4xf32>
    %24 = vector.multi_reduction <add>, %20, %cst_14 [1] : vector<4x16xf32> to vector<4xf32>
    %25 = vector.shape_cast %24 : vector<4xf32> to vector<4x1xf32>
    %26 = arith.addf %2, %25 : vector<4x1xf32>
    %27 = arith.mulf %20, %20 : vector<4x16xf32>
    %cst_15 = arith.constant dense<0.000000e+00> : vector<4xf32>
    %28 = vector.multi_reduction <add>, %27, %cst_15 [1] : vector<4x16xf32> to vector<4xf32>
    %29 = vector.shape_cast %28 : vector<4xf32> to vector<4x1xf32>
    %30 = arith.addf %3, %29 : vector<4x1xf32>
    %c1 = arith.constant 1 : index
    %c0_16 = arith.constant 0 : index
    %c0_17 = arith.constant 0 : index
    %31 = vector.load %arg0[%c1, %c0_16, %c0_17] : memref<2x4x16xf32, #tpu.memory_space<vmem>>, vector<1x4x16xf32>
    %32 = vector.shape_cast %31 : vector<1x4x16xf32> to vector<4x16xf32>
    %33 = tpu.iota {dimensions = array<i32: 1>} : vector<4x16xi32>
    %c0_i32_18 = arith.constant 0 : i32
    %34 = vector.broadcast %c0_i32_18 : i32 to vector<4x16xi32>
    %35 = arith.cmpi eq, %33, %34 : vector<4x16xi32>
    %c1_i32_19 = arith.constant 1 : i32
    %36 = tpu.dynamic_rotate %32 by %c1_i32_19 dim 1 : vector<4x16xf32>, i32 -> vector<4x16xf32>
    %cst_20 = arith.constant 0.000000e+00 : f32
    %37 = vector.broadcast %cst_20 : f32 to vector<4x16xf32>
    %38 = arith.select %35, %37, %36 : vector<4x16xi1>, vector<4x16xf32>
    %c15_i32_21 = arith.constant 15 : i32
    %39 = vector.broadcast %c15_i32_21 : i32 to vector<4x16xi32>
    %40 = arith.cmpi eq, %33, %39 : vector<4x16xi32>
    %c15_i32_22 = arith.constant 15 : i32
    %41 = tpu.dynamic_rotate %32 by %c15_i32_22 dim 1 : vector<4x16xf32>, i32 -> vector<4x16xf32>
    %cst_23 = arith.constant 0.000000e+00 : f32
    %42 = vector.broadcast %cst_23 : f32 to vector<4x16xf32>
    %43 = arith.select %40, %42, %41 : vector<4x16xi1>, vector<4x16xf32>
    %44 = tpu.concatenate %38, %32, %43 in 0 : vector<4x16xf32>, vector<4x16xf32>, vector<4x16xf32> -> vector<12x16xf32>
    %cst_24 = arith.constant dense<0.000000e+00> : vector<4x16xf32>
    %45 = tpu.matmul %0, %44, %cst_24 {dimension_numbers = #tpu.dot_dimension_numbers<[1], [0], [0], [1], [0, 0, 1, 1], [], []>} : vector<4x12xf32>, vector<12x16xf32>, vector<4x16xf32> -> vector<4x16xf32>
    %46 = vector.broadcast %1 : vector<4x1xf32> to vector<4x16xf32>
    %47 = arith.addf %45, %46 : vector<4x16xf32>
    %c1_25 = arith.constant 1 : index
    %c0_26 = arith.constant 0 : index
    %c0_27 = arith.constant 0 : index
    %48 = vector.load %arg10[%c1_25, %c0_26, %c0_27] : memref<2x4x16xf32, #tpu.memory_space<vmem>>, vector<1x4x16xf32>
    %49 = vector.shape_cast %48 : vector<1x4x16xf32> to vector<4x16xf32>
    %50 = vector.shape_cast %47 : vector<4x16xf32> to vector<1x4x16xf32>
    tpu.vector_store %arg10[%c1_25, %c0_26, %c0_27], %50 {strides = array<i32>} : memref<2x4x16xf32, #tpu.memory_space<vmem>>, vector<1x4x16xf32>,
    %cst_28 = arith.constant dense<0.000000e+00> : vector<4xf32>
    %51 = vector.multi_reduction <add>, %47, %cst_28 [1] : vector<4x16xf32> to vector<4xf32>
    %52 = vector.shape_cast %51 : vector<4xf32> to vector<4x1xf32>
    %53 = arith.addf %26, %52 : vector<4x1xf32>
    %54 = arith.mulf %47, %47 : vector<4x16xf32>
    %cst_29 = arith.constant dense<0.000000e+00> : vector<4xf32>
    %55 = vector.multi_reduction <add>, %54, %cst_29 [1] : vector<4x16xf32> to vector<4xf32>
    %56 = vector.shape_cast %55 : vector<4xf32> to vector<4x1xf32>
    %57 = arith.addf %30, %56 : vector<4x1xf32>
    %cst_30 = arith.constant 3.125000e-02 : f32
    %58 = vector.broadcast %cst_30 : f32 to vector<4x1xf32>
    %59 = arith.mulf %53, %58 : vector<4x1xf32>
    %cst_31 = arith.constant 3.125000e-02 : f32
    %60 = vector.broadcast %cst_31 : f32 to vector<4x1xf32>
    %61 = arith.mulf %57, %60 : vector<4x1xf32>
    %62 = arith.mulf %59, %59 : vector<4x1xf32>
    %63 = arith.subf %61, %62 : vector<4x1xf32>
    %cst_32 = arith.constant 9.99999974E-6 : f32
    %64 = vector.broadcast %cst_32 : f32 to vector<4x1xf32>
    %65 = arith.addf %63, %64 : vector<4x1xf32>
    %66 = math.rsqrt %65 : vector<4x1xf32>
    %c0_33 = arith.constant 0 : index
    %c0_34 = arith.constant 0 : index
    %67 = vector.load %arg3[%c0_33, %c0_34] : memref<4x1xf32, #tpu.memory_space<vmem>>, vector<4x1xf32>
    %68 = arith.mulf %67, %66 : vector<4x1xf32>
    %c0_35 = arith.constant 0 : index
    %c0_36 = arith.constant 0 : index
    %69 = vector.load %arg4[%c0_35, %c0_36] : memref<4x1xf32, #tpu.memory_space<vmem>>, vector<4x1xf32>
    %70 = arith.mulf %68, %59 : vector<4x1xf32>
    %71 = arith.subf %69, %70 : vector<4x1xf32>
    %72 = vector.shape_cast %68 : vector<4x1xf32> to vector<1x4x1xf32>
    %73 = vector.shape_cast %71 : vector<4x1xf32> to vector<1x4x1xf32>
    %c0_37 = arith.constant 0 : index
    %c0_38 = arith.constant 0 : index
    %c0_39 = arith.constant 0 : index
    %74 = vector.load %arg10[%c0_37, %c0_38, %c0_39] : memref<2x4x16xf32, #tpu.memory_space<vmem>>, vector<2x4x16xf32>
    %75 = vector.broadcast %72 : vector<1x4x1xf32> to vector<2x4x16xf32>
    %76 = arith.mulf %74, %75 : vector<2x4x16xf32>
    %77 = vector.broadcast %73 : vector<1x4x1xf32> to vector<2x4x16xf32>
    %78 = arith.addf %76, %77 : vector<2x4x16xf32>
    %cst_40 = arith.constant 0.000000e+00 : f32
    %79 = vector.broadcast %cst_40 : f32 to vector<2x4x16xf32>
    %80 = arith.maximumf %78, %79 : vector<2x4x16xf32>
    %c0_41 = arith.constant 0 : index
    %c0_42 = arith.constant 0 : index
    %c0_43 = arith.constant 0 : index
    %81 = vector.load %arg10[%c0_41, %c0_42, %c0_43] : memref<2x4x16xf32, #tpu.memory_space<vmem>>, vector<2x4x16xf32>
    tpu.vector_store %arg10[%c0_41, %c0_42, %c0_43], %80 {strides = array<i32>} : memref<2x4x16xf32, #tpu.memory_space<vmem>>, vector<2x4x16xf32>,
    %c0_44 = arith.constant 0 : index
    %c0_45 = arith.constant 0 : index
    %82 = vector.load %arg5[%c0_44, %c0_45] : memref<4x12xf32, #tpu.memory_space<vmem>>, vector<4x12xf32>
    %c0_46 = arith.constant 0 : index
    %c0_47 = arith.constant 0 : index
    %83 = vector.load %arg6[%c0_46, %c0_47] : memref<4x1xf32, #tpu.memory_space<vmem>>, vector<4x1xf32>
    %cst_48 = arith.constant 0.000000e+00 : f32
    %84 = vector.broadcast %cst_48 : f32 to vector<4x1xf32>
    %cst_49 = arith.constant 0.000000e+00 : f32
    %85 = vector.broadcast %cst_49 : f32 to vector<4x1xf32>
    %c0_50 = arith.constant 0 : index
    %c0_51 = arith.constant 0 : index
    %c0_52 = arith.constant 0 : index
    %86 = vector.load %arg10[%c0_50, %c0_51, %c0_52] : memref<2x4x16xf32, #tpu.memory_space<vmem>>, vector<1x4x16xf32>
    %87 = vector.shape_cast %86 : vector<1x4x16xf32> to vector<4x16xf32>
    %88 = tpu.iota {dimensions = array<i32: 1>} : vector<4x16xi32>
    %c0_i32_53 = arith.constant 0 : i32
    %89 = vector.broadcast %c0_i32_53 : i32 to vector<4x16xi32>
    %90 = arith.cmpi eq, %88, %89 : vector<4x16xi32>
    %c1_i32_54 = arith.constant 1 : i32
    %91 = tpu.dynamic_rotate %87 by %c1_i32_54 dim 1 : vector<4x16xf32>, i32 -> vector<4x16xf32>
    %cst_55 = arith.constant 0.000000e+00 : f32
    %92 = vector.broadcast %cst_55 : f32 to vector<4x16xf32>
    %93 = arith.select %90, %92, %91 : vector<4x16xi1>, vector<4x16xf32>
    %c15_i32_56 = arith.constant 15 : i32
    %94 = vector.broadcast %c15_i32_56 : i32 to vector<4x16xi32>
    %95 = arith.cmpi eq, %88, %94 : vector<4x16xi32>
    %c15_i32_57 = arith.constant 15 : i32
    %96 = tpu.dynamic_rotate %87 by %c15_i32_57 dim 1 : vector<4x16xf32>, i32 -> vector<4x16xf32>
    %cst_58 = arith.constant 0.000000e+00 : f32
    %97 = vector.broadcast %cst_58 : f32 to vector<4x16xf32>
    %98 = arith.select %95, %97, %96 : vector<4x16xi1>, vector<4x16xf32>
    %99 = tpu.concatenate %93, %87, %98 in 0 : vector<4x16xf32>, vector<4x16xf32>, vector<4x16xf32> -> vector<12x16xf32>
    %cst_59 = arith.constant dense<0.000000e+00> : vector<4x16xf32>
    %100 = tpu.matmul %82, %99, %cst_59 {dimension_numbers = #tpu.dot_dimension_numbers<[1], [0], [0], [1], [0, 0, 1, 1], [], []>} : vector<4x12xf32>, vector<12x16xf32>, vector<4x16xf32> -> vector<4x16xf32>
    %101 = vector.broadcast %83 : vector<4x1xf32> to vector<4x16xf32>
    %102 = arith.addf %100, %101 : vector<4x16xf32>
    %c0_60 = arith.constant 0 : index
    %c0_61 = arith.constant 0 : index
    %c0_62 = arith.constant 0 : index
    %103 = vector.load %arg9[%c0_60, %c0_61, %c0_62] : memref<2x4x16xf32, #tpu.memory_space<vmem>>, vector<1x4x16xf32>
    %104 = vector.shape_cast %103 : vector<1x4x16xf32> to vector<4x16xf32>
    %105 = vector.shape_cast %102 : vector<4x16xf32> to vector<1x4x16xf32>
    tpu.vector_store %arg9[%c0_60, %c0_61, %c0_62], %105 {strides = array<i32>} : memref<2x4x16xf32, #tpu.memory_space<vmem>>, vector<1x4x16xf32>,
    %cst_63 = arith.constant dense<0.000000e+00> : vector<4xf32>
    %106 = vector.multi_reduction <add>, %102, %cst_63 [1] : vector<4x16xf32> to vector<4xf32>
    %107 = vector.shape_cast %106 : vector<4xf32> to vector<4x1xf32>
    %108 = arith.addf %84, %107 : vector<4x1xf32>
    %109 = arith.mulf %102, %102 : vector<4x16xf32>
    %cst_64 = arith.constant dense<0.000000e+00> : vector<4xf32>
    %110 = vector.multi_reduction <add>, %109, %cst_64 [1] : vector<4x16xf32> to vector<4xf32>
    %111 = vector.shape_cast %110 : vector<4xf32> to vector<4x1xf32>
    %112 = arith.addf %85, %111 : vector<4x1xf32>
    %c1_65 = arith.constant 1 : index
    %c0_66 = arith.constant 0 : index
    %c0_67 = arith.constant 0 : index
    %113 = vector.load %arg10[%c1_65, %c0_66, %c0_67] : memref<2x4x16xf32, #tpu.memory_space<vmem>>, vector<1x4x16xf32>
    %114 = vector.shape_cast %113 : vector<1x4x16xf32> to vector<4x16xf32>
    %115 = tpu.iota {dimensions = array<i32: 1>} : vector<4x16xi32>
    %c0_i32_68 = arith.constant 0 : i32
    %116 = vector.broadcast %c0_i32_68 : i32 to vector<4x16xi32>
    %117 = arith.cmpi eq, %115, %116 : vector<4x16xi32>
    %c1_i32_69 = arith.constant 1 : i32
    %118 = tpu.dynamic_rotate %114 by %c1_i32_69 dim 1 : vector<4x16xf32>, i32 -> vector<4x16xf32>
    %cst_70 = arith.constant 0.000000e+00 : f32
    %119 = vector.broadcast %cst_70 : f32 to vector<4x16xf32>
    %120 = arith.select %117, %119, %118 : vector<4x16xi1>, vector<4x16xf32>
    %c15_i32_71 = arith.constant 15 : i32
    %121 = vector.broadcast %c15_i32_71 : i32 to vector<4x16xi32>
    %122 = arith.cmpi eq, %115, %121 : vector<4x16xi32>
    %c15_i32_72 = arith.constant 15 : i32
    %123 = tpu.dynamic_rotate %114 by %c15_i32_72 dim 1 : vector<4x16xf32>, i32 -> vector<4x16xf32>
    %cst_73 = arith.constant 0.000000e+00 : f32
    %124 = vector.broadcast %cst_73 : f32 to vector<4x16xf32>
    %125 = arith.select %122, %124, %123 : vector<4x16xi1>, vector<4x16xf32>
    %126 = tpu.concatenate %120, %114, %125 in 0 : vector<4x16xf32>, vector<4x16xf32>, vector<4x16xf32> -> vector<12x16xf32>
    %cst_74 = arith.constant dense<0.000000e+00> : vector<4x16xf32>
    %127 = tpu.matmul %82, %126, %cst_74 {dimension_numbers = #tpu.dot_dimension_numbers<[1], [0], [0], [1], [0, 0, 1, 1], [], []>} : vector<4x12xf32>, vector<12x16xf32>, vector<4x16xf32> -> vector<4x16xf32>
    %128 = vector.broadcast %83 : vector<4x1xf32> to vector<4x16xf32>
    %129 = arith.addf %127, %128 : vector<4x16xf32>
    %c1_75 = arith.constant 1 : index
    %c0_76 = arith.constant 0 : index
    %c0_77 = arith.constant 0 : index
    %130 = vector.load %arg9[%c1_75, %c0_76, %c0_77] : memref<2x4x16xf32, #tpu.memory_space<vmem>>, vector<1x4x16xf32>
    %131 = vector.shape_cast %130 : vector<1x4x16xf32> to vector<4x16xf32>
    %132 = vector.shape_cast %129 : vector<4x16xf32> to vector<1x4x16xf32>
    tpu.vector_store %arg9[%c1_75, %c0_76, %c0_77], %132 {strides = array<i32>} : memref<2x4x16xf32, #tpu.memory_space<vmem>>, vector<1x4x16xf32>,
    %cst_78 = arith.constant dense<0.000000e+00> : vector<4xf32>
    %133 = vector.multi_reduction <add>, %129, %cst_78 [1] : vector<4x16xf32> to vector<4xf32>
    %134 = vector.shape_cast %133 : vector<4xf32> to vector<4x1xf32>
    %135 = arith.addf %108, %134 : vector<4x1xf32>
    %136 = arith.mulf %129, %129 : vector<4x16xf32>
    %cst_79 = arith.constant dense<0.000000e+00> : vector<4xf32>
    %137 = vector.multi_reduction <add>, %136, %cst_79 [1] : vector<4x16xf32> to vector<4xf32>
    %138 = vector.shape_cast %137 : vector<4xf32> to vector<4x1xf32>
    %139 = arith.addf %112, %138 : vector<4x1xf32>
    %cst_80 = arith.constant 3.125000e-02 : f32
    %140 = vector.broadcast %cst_80 : f32 to vector<4x1xf32>
    %141 = arith.mulf %135, %140 : vector<4x1xf32>
    %cst_81 = arith.constant 3.125000e-02 : f32
    %142 = vector.broadcast %cst_81 : f32 to vector<4x1xf32>
    %143 = arith.mulf %139, %142 : vector<4x1xf32>
    %144 = arith.mulf %141, %141 : vector<4x1xf32>
    %145 = arith.subf %143, %144 : vector<4x1xf32>
    %cst_82 = arith.constant 9.99999974E-6 : f32
    %146 = vector.broadcast %cst_82 : f32 to vector<4x1xf32>
    %147 = arith.addf %145, %146 : vector<4x1xf32>
    %148 = math.rsqrt %147 : vector<4x1xf32>
    %c0_83 = arith.constant 0 : index
    %c0_84 = arith.constant 0 : index
    %149 = vector.load %arg7[%c0_83, %c0_84] : memref<4x1xf32, #tpu.memory_space<vmem>>, vector<4x1xf32>
    %150 = arith.mulf %149, %148 : vector<4x1xf32>
    %c0_85 = arith.constant 0 : index
    %c0_86 = arith.constant 0 : index
    %151 = vector.load %arg8[%c0_85, %c0_86] : memref<4x1xf32, #tpu.memory_space<vmem>>, vector<4x1xf32>
    %152 = arith.mulf %150, %141 : vector<4x1xf32>
    %153 = arith.subf %151, %152 : vector<4x1xf32>
    %154 = vector.shape_cast %150 : vector<4x1xf32> to vector<1x4x1xf32>
    %155 = vector.shape_cast %153 : vector<4x1xf32> to vector<1x4x1xf32>
    %c0_87 = arith.constant 0 : index
    %c0_88 = arith.constant 0 : index
    %c0_89 = arith.constant 0 : index
    %156 = vector.load %arg9[%c0_87, %c0_88, %c0_89] : memref<2x4x16xf32, #tpu.memory_space<vmem>>, vector<2x4x16xf32>
    %157 = vector.broadcast %154 : vector<1x4x1xf32> to vector<2x4x16xf32>
    %158 = arith.mulf %156, %157 : vector<2x4x16xf32>
    %159 = vector.broadcast %155 : vector<1x4x1xf32> to vector<2x4x16xf32>
    %160 = arith.addf %158, %159 : vector<2x4x16xf32>
    %c0_90 = arith.constant 0 : index
    %c0_91 = arith.constant 0 : index
    %c0_92 = arith.constant 0 : index
    %161 = vector.load %arg0[%c0_90, %c0_91, %c0_92] : memref<2x4x16xf32, #tpu.memory_space<vmem>>, vector<2x4x16xf32>
    %162 = arith.addf %160, %161 : vector<2x4x16xf32>
    %cst_93 = arith.constant 0.000000e+00 : f32
    %163 = vector.broadcast %cst_93 : f32 to vector<2x4x16xf32>
    %164 = arith.maximumf %162, %163 : vector<2x4x16xf32>
    %c0_94 = arith.constant 0 : index
    %c0_95 = arith.constant 0 : index
    %c0_96 = arith.constant 0 : index
    %165 = vector.load %arg9[%c0_94, %c0_95, %c0_96] : memref<2x4x16xf32, #tpu.memory_space<vmem>>, vector<2x4x16xf32>
    tpu.vector_store %arg9[%c0_94, %c0_95, %c0_96], %164 {strides = array<i32>} : memref<2x4x16xf32, #tpu.memory_space<vmem>>, vector<2x4x16xf32>,
    return
  }
}

</mosaic_0001>

<llo_original>
// kernel: basic_block_forward.1
$region0: #{basic_block_forward.1}
  #allocation0 [shape = 'u32[]', space=smem, size = 0x4, offset = 0x4, fixed_abs, tag = 'smem constant byte address 0x4 - core index']
  #allocation1 [shape = 'u32[144,128]{1,0:T(1,128)}', space=vmem, size = 0x12000, scoped, tag = 'internal scratch']
  #allocation2 [shape = 'f32[2,4,16]{2,1,0:T(4,128)}', space=vmem, size = 0x1000, scoped, tag = 'scratch operand']
  %s0 = inlined_call_operand.vmem [shape: f32[2,4,16], index: 0, kind: input, shape index: {}]
  %s1 = inlined_call_operand.vmem [shape: f32[4,12], index: 1, kind: input, shape index: {}]
  %s2 = inlined_call_operand.vmem [shape: f32[4,1], index: 2, kind: input, shape index: {}]
  %s3 = inlined_call_operand.vmem [shape: f32[4,1], index: 3, kind: input, shape index: {}]
  %s4 = inlined_call_operand.vmem [shape: f32[4,1], index: 4, kind: input, shape index: {}]
  %s5 = inlined_call_operand.vmem [shape: f32[4,12], index: 5, kind: input, shape index: {}]
  %s6 = inlined_call_operand.vmem [shape: f32[4,1], index: 6, kind: input, shape index: {}]
  %s7 = inlined_call_operand.vmem [shape: f32[4,1], index: 7, kind: input, shape index: {}]
  %s8 = inlined_call_operand.vmem [shape: f32[4,1], index: 8, kind: input, shape index: {}]
  %s9 = inlined_call_operand.hbm [shape: f32[2,4,16], index: 9, kind: output, shape index: {}]
  %s10 = sld [smem:[#allocation0]]
  $region46: #{basic_block_forward.1} parent=0
    _
  %s12 = ssub.s32 1, %s10
  %s13 = scalar_select 0, %s12, %s10
  $region1: #{basic_block_forward.1} parent=0
    #allocation3 [shape = 'u8[4096]{0}', space=vmem, size = 0x1000, scoped, tag = 'output window, operand 0, single buffered']
    #allocation4 [shape = 's32[1]{0}', space=sflag, size = 0x4, scoped, tag = 'scoped memory for basic_block_forward.1']
    %14 = vsyncpa [#allocation4], 0
    // Predicated region
    $region2: #{basic_block_forward.1} parent=1 // pred_check
      _
    $region3: #{basic_block_forward.1} parent=1 // pred_check_branch
      %16 = sbr.rel (0) target = $region5
    $region4: #{basic_block_forward.1} parent=1 // pred_region
      _
    $region5: #{basic_block_forward.1} parent=1 // pred_fallthru
      _
    // Predicated region
    $region6: #{basic_block_forward.1} parent=1 // pred_check
      _
    $region7: #{basic_block_forward.1} parent=1 // pred_check_branch
      %18 = sbr.rel (0) target = $region9
    $region8: #{basic_block_forward.1} parent=1 // pred_region
      _
    $region9: #{basic_block_forward.1} parent=1 // pred_fallthru
      _
    // Predicated region
    $region10: #{basic_block_forward.1} parent=1 // pred_check
      _
    $region11: #{basic_block_forward.1} parent=1 // pred_check_branch
      %20 = sbr.rel (0) target = $region13
    $region12: #{basic_block_forward.1} parent=1 // pred_region
      _
    $region13: #{basic_block_forward.1} parent=1 // pred_fallthru
      _
    // Predicated region
    $region14: #{basic_block_forward.1} parent=1 // pred_check
      _
    $region15: #{basic_block_forward.1} parent=1 // pred_check_branch
      %22 = sbr.rel (0) target = $region17
    $region16: #{basic_block_forward.1} parent=1 // pred_region
      _
    $region17: #{basic_block_forward.1} parent=1 // pred_fallthru
      _
    // Predicated region
    $region18: #{basic_block_forward.1} parent=1 // pred_check
      _
    $region19: #{basic_block_forward.1} parent=1 // pred_check_branch
      %24 = sbr.rel (0) target = $region21
    $region20: #{basic_block_forward.1} parent=1 // pred_region
      _
    $region21: #{basic_block_forward.1} parent=1 // pred_fallthru
      _
    // Predicated region
    $region22: #{basic_block_forward.1} parent=1 // pred_check
      _
    $region23: #{basic_block_forward.1} parent=1 // pred_check_branch
      %26 = sbr.rel (0) target = $region25
    $region24: #{basic_block_forward.1} parent=1 // pred_region
      _
    $region25: #{basic_block_forward.1} parent=1 // pred_fallthru
      _
    // Predicated region
    $region26: #{basic_block_forward.1} parent=1 // pred_check
      _
    $region27: #{basic_block_forward.1} parent=1 // pred_check_branch
      %28 = sbr.rel (0) target = $region29
    $region28: #{basic_block_forward.1} parent=1 // pred_region
      _
    $region29: #{basic_block_forward.1} parent=1 // pred_fallthru
      _
    // Predicated region
    $region30: #{basic_block_forward.1} parent=1 // pred_check
      _
    $region31: #{basic_block_forward.1} parent=1 // pred_check_branch
      %30 = sbr.rel (0) target = $region33
    $region32: #{basic_block_forward.1} parent=1 // pred_region
      _
    $region33: #{basic_block_forward.1} parent=1 // pred_fallthru
      _
    // Predicated region
    $region34: #{basic_block_forward.1} parent=1 // pred_check
      _
    $region35: #{basic_block_forward.1} parent=1 // pred_check_branch
      %32 = sbr.rel (0) target = $region37
    $region36: #{basic_block_forward.1} parent=1 // pred_region
      _
    $region37: #{basic_block_forward.1} parent=1 // pred_fallthru
      _
    %v33 = vld [vmem:[%s1] sm:$0xf]
    %v34 = vld [vmem:[%s2] sm:$0xf]
    %v35 = vld [vmem:[%s0] sm:$0xf]
    %v36 = vlaneseq
    %v37 = vand.u32 %v36, 127
    %vm38 = vcmp.eq.s32.totalorder %v37, 0
    %vm39 = vcmask 1047680
    %40 = vrot.lane.b32.xlu0 %v35, 16
    %v41 = vpop.permute.xlu0 %40
    %v42 = vsel %vm39, %v41, %v35
    %43 = vrot.lane.b32.xlu0 %v42, 16
    %v44 = vpop.permute.xlu0 %43
    %v45 = vsel %vm39, %v44, %v35
    %47 = vrot.lane.b32.xlu0 %v45, 113
    %v48 = vpop.permute.xlu0 %47
    %v50 = vsel %vm38, 0.0, %v48
    %vm51 = vcmp.eq.s32.totalorder %v37, 15
    %52 = vrot.lane.b32.xlu0 %v45, 127
    %v53 = vpop.permute.xlu0 %52
    %v55 = vsel %vm51, 0.0, %v53
    %v57 = vrot.slane %v35, 4
    %vm59 = vcmask 1043456
    %v60 = vsel %vm59, %v50, %v57
    %62 = vset.pattern.permute.xlu0 0
    %63 = vperm.xlu0 %62, %v34
    %v64 = vpop.permute.xlu0 %63
    %vm66 = vcmask 97280
    %v68 = vsel %vm66, %v33, 0
    %v71 = vsel %vm59, %v55, 0
    %73 = vmatprep.subr.mxu0 0.0
    %74 = vmatpush1.msra.mxu0 %v60
    %75 = vmatprep.subr.mxu0 0.0
    %76 = vmatpush1.msra.mxu0 %v71
    %77 = vmatprep.subr.mxu0 0.0
    %78 = vmatpush1.msra.mxu0 0.0
    %79 = vmatprep.subr.mxu0 0.0
    %80 = vmatpush1.msra.mxu0 0.0
    %81 = vmatprep.subr.mxu0 0.0
    %82 = vmatpush1.msra.mxu0 0.0
    %83 = vmatprep.subr.mxu0 0.0
    %84 = vmatpush1.msra.mxu0 0.0
    %85 = vmatprep.subr.mxu0 0.0
    %86 = vmatpush1.msra.mxu0 0.0
    %87 = vmatprep.subr.mxu0 0.0
    %88 = vmatpush1.msra.mxu0 0.0
    %89 = vmatprep.subr.mxu0 0.0
    %90 = vmatpush1.msra.mxu0 0.0
    %91 = vmatprep.subr.mxu0 0.0
    %92 = vmatpush1.msra.mxu0 0.0
    %93 = vmatprep.subr.mxu0 0.0
    %94 = vmatpush1.msra.mxu0 0.0
    %95 = vmatprep.subr.mxu0 0.0
    %96 = vmatpush1.msra.mxu0 0.0
    %97 = vmatprep.subr.mxu0 0.0
    %98 = vmatpush1.msra.mxu0 0.0
    %99 = vmatprep.subr.mxu0 0.0
    %100 = vmatpush1.msra.mxu0 0.0
    %101 = vmatprep.subr.mxu0 0.0
    %102 = vmatpush1.msra.mxu0 0.0
    %103 = vmatprep.subr.mxu0 0.0
    %104 = vmatpush1.msra.mxu0 0.0
    %105 = vmatprep.subr.mxu0 0.0
    %106 = vmatpush1.msra.mxu0 0.0
    %107 = vmatprep.subr.mxu0 0.0
    %108 = vmatpush1.msra.mxu0 0.0
    %109 = vmatprep.subr.mxu0 0.0
    %110 = vmatpush1.msra.mxu0 0.0
    %111 = vmatprep.subr.mxu0 0.0
    %112 = vmatpush1.msra.mxu0 0.0
    %113 = vmatprep.subr.mxu0 0.0
    %114 = vmatpush1.msra.mxu0 0.0
    %115 = vmatprep.subr.mxu0 0.0
    %116 = vmatpush1.msra.mxu0 0.0
    %117 = vmatprep.subr.mxu0 0.0
    %118 = vmatpush1.msra.mxu0 0.0
    %119 = vmatprep.subr.mxu0 0.0
    %120 = vmatpush1.msra.mxu0 0.0
    %121 = vmatprep.subr.mxu0 0.0
    %122 = vmatpush1.msra.mxu0 0.0
    %123 = vmatprep.subr.mxu0 0.0
    %124 = vmatpush1.msra.mxu0 0.0
    %125 = vmatprep.subr.mxu0 0.0
    %126 = vmatpush1.msra.mxu0 0.0
    %127 = vmatprep.subr.mxu0 0.0
    %128 = vmatpush1.msra.mxu0 0.0
    %129 = vmatprep.subr.mxu0 0.0
    %130 = vmatpush1.msra.mxu0 0.0
    %131 = vmatprep.subr.mxu0 0.0
    %132 = vmatpush1.msra.mxu0 0.0
    %133 = vmatprep.subr.mxu0 0.0
    %134 = vmatpush1.msra.mxu0 0.0
    %135 = vmatprep.subr.mxu0 0.0
    %136 = vmatpush1.msra.mxu0 0.0
    %137 = vmatprep.mubr.f32.mxu0 0.0
    %138 = vmatmul.mubr.f32.gmra.mrb[0].mxu0 %v68
    %v139 = vpop.f32.mrb[0].mxu0
    %v140 = vadd.f32 %v64, %v139
    %v141 = vpop.f32.mrb[0].mxu0
    %142 = vdwg.mxu0
    %vm143 = vcmask 125952
    %144 = vst.msk [vmem:[#allocation2] sm:$0xf] %vm143, %v140
    %v145 = vsel %vm143, %v140, 0.0
    %146 = vadd.xlane.f32.xlu0 %v145
    %v147 = vpop.xlane.xlu0 %146
    %v148 = vadd.f32 %v147, 0.0
    %v149 = vmul.f32 %v140, %v140
    %v150 = vsel %vm143, %v149, 0.0
    %151 = vadd.xlane.f32.xlu0 %v150
    %v152 = vpop.xlane.xlu0 %151
    %v153 = vadd.f32 %v152, 0.0
    %s154 = scalar_lea.vmem %s0, 4
    %v155 = vld [vmem:[%s154] sm:$0xf]
    %156 = vrot.lane.b32.xlu0 %v155, 16
    %v157 = vpop.permute.xlu0 %156
    %v158 = vsel %vm39, %v157, %v155
    %159 = vrot.lane.b32.xlu0 %v158, 16
    %v160 = vpop.permute.xlu0 %159
    %v161 = vsel %vm39, %v160, %v155
    %163 = vrot.lane.b32.xlu0 %v161, 113
    %v164 = vpop.permute.xlu0 %163
    %v166 = vsel %vm38, 0.0, %v164
    %167 = vrot.lane.b32.xlu0 %v161, 127
    %v168 = vpop.permute.xlu0 %167
    %v170 = vsel %vm51, 0.0, %v168
    %v172 = vrot.slane %v155, 4
    %v174 = vsel %vm59, %v166, %v172
    %v176 = vsel %vm59, %v170, 0
    %178 = vmatprep.subr.mxu0 0.0
    %179 = vmatpush1.msra.mxu0 %v174
    %180 = vmatprep.subr.mxu0 0.0
    %181 = vmatpush1.msra.mxu0 %v176
    %182 = vmatprep.subr.mxu0 0.0
    %183 = vmatpush1.msra.mxu0 0.0
    %184 = vmatprep.subr.mxu0 0.0
    %185 = vmatpush1.msra.mxu0 0.0
    %186 = vmatprep.subr.mxu0 0.0
    %187 = vmatpush1.msra.mxu0 0.0
    %188 = vmatprep.subr.mxu0 0.0
    %189 = vmatpush1.msra.mxu0 0.0
    %190 = vmatprep.subr.mxu0 0.0
    %191 = vmatpush1.msra.mxu0 0.0
    %192 = vmatprep.subr.mxu0 0.0
    %193 = vmatpush1.msra.mxu0 0.0
    %194 = vmatprep.subr.mxu0 0.0
    %195 = vmatpush1.msra.mxu0 0.0
    %196 = vmatprep.subr.mxu0 0.0
    %197 = vmatpush1.msra.mxu0 0.0
    %198 = vmatprep.subr.mxu0 0.0
    %199 = vmatpush1.msra.mxu0 0.0
    %200 = vmatprep.subr.mxu0 0.0
    %201 = vmatpush1.msra.mxu0 0.0
    %202 = vmatprep.subr.mxu0 0.0
    %203 = vmatpush1.msra.mxu0 0.0
    %204 = vmatprep.subr.mxu0 0.0
    %205 = vmatpush1.msra.mxu0 0.0
    %206 = vmatprep.subr.mxu0 0.0
    %207 = vmatpush1.msra.mxu0 0.0
    %208 = vmatprep.subr.mxu0 0.0
    %209 = vmatpush1.msra.mxu0 0.0
    %210 = vmatprep.subr.mxu0 0.0
    %211 = vmatpush1.msra.mxu0 0.0
    %212 = vmatprep.subr.mxu0 0.0
    %213 = vmatpush1.msra.mxu0 0.0
    %214 = vmatprep.subr.mxu0 0.0
    %215 = vmatpush1.msra.mxu0 0.0
    %216 = vmatprep.subr.mxu0 0.0
    %217 = vmatpush1.msra.mxu0 0.0
    %218 = vmatprep.subr.mxu0 0.0
    %219 = vmatpush1.msra.mxu0 0.0
    %220 = vmatprep.subr.mxu0 0.0
    %221 = vmatpush1.msra.mxu0 0.0
    %222 = vmatprep.subr.mxu0 0.0
    %223 = vmatpush1.msra.mxu0 0.0
    %224 = vmatprep.subr.mxu0 0.0
    %225 = vmatpush1.msra.mxu0 0.0
    %226 = vmatprep.subr.mxu0 0.0
    %227 = vmatpush1.msra.mxu0 0.0
    %228 = vmatprep.subr.mxu0 0.0
    %229 = vmatpush1.msra.mxu0 0.0
    %230 = vmatprep.subr.mxu0 0.0
    %231 = vmatpush1.msra.mxu0 0.0
    %232 = vmatprep.subr.mxu0 0.0
    %233 = vmatpush1.msra.mxu0 0.0
    %234 = vmatprep.subr.mxu0 0.0
    %235 = vmatpush1.msra.mxu0 0.0
    %236 = vmatprep.subr.mxu0 0.0
    %237 = vmatpush1.msra.mxu0 0.0
    %238 = vmatprep.subr.mxu0 0.0
    %239 = vmatpush1.msra.mxu0 0.0
    %240 = vmatprep.subr.mxu0 0.0
    %241 = vmatpush1.msra.mxu0 0.0
    %242 = vmatprep.mubr.f32.mxu0 0.0
    %243 = vmatmul.mubr.f32.gmra.mrb[0].mxu0 %v68
    %v244 = vpop.f32.mrb[0].mxu0
    %v245 = vadd.f32 %v64, %v244
    %v246 = vpop.f32.mrb[0].mxu0
    %247 = vdwg.mxu0
    %s248 = scalar_lea.vmem [#allocation2], 4
    %249 = vst.msk [vmem:[%s248] sm:$0xf] %vm143, %v245
    %v250 = vsel %vm143, %v245, 0.0
    %251 = vadd.xlane.f32.xlu0 %v250
    %v252 = vpop.xlane.xlu0 %251
    %v253 = vadd.f32 %v148, %v252
    %v254 = vmul.f32 %v245, %v245
    %v255 = vsel %vm143, %v254, 0.0
    %256 = vadd.xlane.f32.xlu0 %v255
    %v257 = vpop.xlane.xlu0 %256
    %v258 = vadd.f32 %v153, %v257
    %v259 = vmul.f32 %v253, 0.03125
    %v260 = vmul.f32 %v258, 0.03125
    %v261 = vmul.f32 %v259, %v259
    %v262 = vsub.f32 %v260, %v261
    %v263 = vadd.f32 %v262, 1e-05
    %v264 = vrsqrt.pop %v263
    %v265 = vld [vmem:[%s3] sm:$0xf]
    %v266 = vmul.f32 %v265, %v264
    %v267 = vld [vmem:[%s4] sm:$0xf]
    %v268 = vmul.f32 %v266, %v259
    %v269 = vsub.f32 %v267, %v268
    %v270 = vld [vmem:[#allocation2] sm:$0xf]
    %v271 = vld [vmem:[#allocation2 + $0x4] sm:$0xf]
    %273 = vset.pattern.permute.xlu0 0
    %274 = vperm.xlu0 %273, %v266
    %v275 = vpop.permute.xlu0 %274
    %v277 = vmul.f32 %v270, %v275
    %v278 = vmul.f32 %v271, %v275
    %280 = vset.pattern.permute.xlu0 0
    %281 = vperm.xlu0 %280, %v269
    %v282 = vpop.permute.xlu0 %281
    %v284 = vadd.f32 %v277, %v282
    %v285 = vadd.f32 %v278, %v282
    %v286 = vmax.f32 %v284, 0.0
    %v287 = vmax.f32 %v285, 0.0
    %288 = vst.msk [vmem:[#allocation2] sm:$0xf] %vm143, %v286
    %289 = vst.msk [vmem:[#allocation2 + $0x4] sm:$0xf] %vm143, %v287
    %v290 = vld [vmem:[%s5] sm:$0xf]
    %v291 = vld [vmem:[%s6] sm:$0xf]
    %v292 = vld [vmem:[#allocation2] sm:$0xf]
    %293 = vrot.lane.b32.xlu0 %v292, 16
    %v294 = vpop.permute.xlu0 %293
    %v295 = vsel %vm39, %v294, %v292
    %296 = vrot.lane.b32.xlu0 %v295, 16
    %v297 = vpop.permute.xlu0 %296
    %v298 = vsel %vm39, %v297, %v292
    %300 = vrot.lane.b32.xlu0 %v298, 113
    %v301 = vpop.permute.xlu0 %300
    %v303 = vsel %vm38, 0.0, %v301
    %304 = vrot.lane.b32.xlu0 %v298, 127
    %v305 = vpop.permute.xlu0 %304
    %v307 = vsel %vm51, 0.0, %v305
    %v309 = vrot.slane %v292, 4
    %v311 = vsel %vm59, %v303, %v309
    %313 = vset.pattern.permute.xlu0 0
    %314 = vperm.xlu0 %313, %v291
    %v315 = vpop.permute.xlu0 %314
    %v318 = vsel %vm66, %v290, 0
    %v321 = vsel %vm59, %v307, 0
    %323 = vmatprep.subr.mxu0 0.0
    %324 = vmatpush1.msra.mxu0 %v311
    %325 = vmatprep.subr.mxu0 0.0
    %326 = vmatpush1.msra.mxu0 %v321
    %327 = vmatprep.subr.mxu0 0.0
    %328 = vmatpush1.msra.mxu0 0.0
    %329 = vmatprep.subr.mxu0 0.0
    %330 = vmatpush1.msra.mxu0 0.0
    %331 = vmatprep.subr.mxu0 0.0
    %332 = vmatpush1.msra.mxu0 0.0
    %333 = vmatprep.subr.mxu0 0.0
    %334 = vmatpush1.msra.mxu0 0.0
    %335 = vmatprep.subr.mxu0 0.0
    %336 = vmatpush1.msra.mxu0 0.0
    %337 = vmatprep.subr.mxu0 0.0
    %338 = vmatpush1.msra.mxu0 0.0
    %339 = vmatprep.subr.mxu0 0.0
    %340 = vmatpush1.msra.mxu0 0.0
    %341 = vmatprep.subr.mxu0 0.0
    %342 = vmatpush1.msra.mxu0 0.0
    %343 = vmatprep.subr.mxu0 0.0
    %344 = vmatpush1.msra.mxu0 0.0
    %345 = vmatprep.subr.mxu0 0.0
    %346 = vmatpush1.msra.mxu0 0.0
    %347 = vmatprep.subr.mxu0 0.0
    %348 = vmatpush1.msra.mxu0 0.0
    %349 = vmatprep.subr.mxu0 0.0
    %350 = vmatpush1.msra.mxu0 0.0
    %351 = vmatprep.subr.mxu0 0.0
    %352 = vmatpush1.msra.mxu0 0.0
    %353 = vmatprep.subr.mxu0 0.0
    %354 = vmatpush1.msra.mxu0 0.0
    %355 = vmatprep.subr.mxu0 0.0
    %356 = vmatpush1.msra.mxu0 0.0
    %357 = vmatprep.subr.mxu0 0.0
    %358 = vmatpush1.msra.mxu0 0.0
    %359 = vmatprep.subr.mxu0 0.0
    %360 = vmatpush1.msra.mxu0 0.0
    %361 = vmatprep.subr.mxu0 0.0
    %362 = vmatpush1.msra.mxu0 0.0
    %363 = vmatprep.subr.mxu0 0.0
    %364 = vmatpush1.msra.mxu0 0.0
    %365 = vmatprep.subr.mxu0 0.0
    %366 = vmatpush1.msra.mxu0 0.0
    %367 = vmatprep.subr.mxu0 0.0
    %368 = vmatpush1.msra.mxu0 0.0
    %369 = vmatprep.subr.mxu0 0.0
    %370 = vmatpush1.msra.mxu0 0.0
    %371 = vmatprep.subr.mxu0 0.0
    %372 = vmatpush1.msra.mxu0 0.0
    %373 = vmatprep.subr.mxu0 0.0
    %374 = vmatpush1.msra.mxu0 0.0
    %375 = vmatprep.subr.mxu0 0.0
    %376 = vmatpush1.msra.mxu0 0.0
    %377 = vmatprep.subr.mxu0 0.0
    %378 = vmatpush1.msra.mxu0 0.0
    %379 = vmatprep.subr.mxu0 0.0
    %380 = vmatpush1.msra.mxu0 0.0
    %381 = vmatprep.subr.mxu0 0.0
    %382 = vmatpush1.msra.mxu0 0.0
    %383 = vmatprep.subr.mxu0 0.0
    %384 = vmatpush1.msra.mxu0 0.0
    %385 = vmatprep.subr.mxu0 0.0
    %386 = vmatpush1.msra.mxu0 0.0
    %387 = vmatprep.mubr.f32.mxu0 0.0
    %388 = vmatmul.mubr.f32.gmra.mrb[0].mxu0 %v318
    %v389 = vpop.f32.mrb[0].mxu0
    %v390 = vadd.f32 %v315, %v389
    %v391 = vpop.f32.mrb[0].mxu0
    %392 = vdwg.mxu0
    %393 = vst.msk [vmem:[#allocation3] sm:$0xf] %vm143, %v390
    %v394 = vsel %vm143, %v390, 0.0
    %395 = vadd.xlane.f32.xlu0 %v394
    %v396 = vpop.xlane.xlu0 %395
    %v397 = vadd.f32 %v396, 0.0
    %v398 = vmul.f32 %v390, %v390
    %v399 = vsel %vm143, %v398, 0.0
    %400 = vadd.xlane.f32.xlu0 %v399
    %v401 = vpop.xlane.xlu0 %400
    %v402 = vadd.f32 %v401, 0.0
    %v403 = vld [vmem:[%s248] sm:$0xf]
    %404 = vrot.lane.b32.xlu0 %v403, 16
    %v405 = vpop.permute.xlu0 %404
    %v406 = vsel %vm39, %v405, %v403
    %407 = vrot.lane.b32.xlu0 %v406, 16
    %v408 = vpop.permute.xlu0 %407
    %v409 = vsel %vm39, %v408, %v403
    %411 = vrot.lane.b32.xlu0 %v409, 113
    %v412 = vpop.permute.xlu0 %411
    %v414 = vsel %vm38, 0.0, %v412
    %415 = vrot.lane.b32.xlu0 %v409, 127
    %v416 = vpop.permute.xlu0 %415
    %v418 = vsel %vm51, 0.0, %v416
    %v420 = vrot.slane %v403, 4
    %v422 = vsel %vm59, %v414, %v420
    %v424 = vsel %vm59, %v418, 0
    %426 = vmatprep.subr.mxu0 0.0
    %427 = vmatpush1.msra.mxu0 %v422
    %428 = vmatprep.subr.mxu0 0.0
    %429 = vmatpush1.msra.mxu0 %v424
    %430 = vmatprep.subr.mxu0 0.0
    %431 = vmatpush1.msra.mxu0 0.0
    %432 = vmatprep.subr.mxu0 0.0
    %433 = vmatpush1.msra.mxu0 0.0
    %434 = vmatprep.subr.mxu0 0.0
    %435 = vmatpush1.msra.mxu0 0.0
    %436 = vmatprep.subr.mxu0 0.0
    %437 = vmatpush1.msra.mxu0 0.0
    %438 = vmatprep.subr.mxu0 0.0
    %439 = vmatpush1.msra.mxu0 0.0
    %440 = vmatprep.subr.mxu0 0.0
    %441 = vmatpush1.msra.mxu0 0.0
    %442 = vmatprep.subr.mxu0 0.0
    %443 = vmatpush1.msra.mxu0 0.0
    %444 = vmatprep.subr.mxu0 0.0
    %445 = vmatpush1.msra.mxu0 0.0
    %446 = vmatprep.subr.mxu0 0.0
    %447 = vmatpush1.msra.mxu0 0.0
    %448 = vmatprep.subr.mxu0 0.0
    %449 = vmatpush1.msra.mxu0 0.0
    %450 = vmatprep.subr.mxu0 0.0
    %451 = vmatpush1.msra.mxu0 0.0
    %452 = vmatprep.subr.mxu0 0.0
    %453 = vmatpush1.msra.mxu0 0.0
    %454 = vmatprep.subr.mxu0 0.0
    %455 = vmatpush1.msra.mxu0 0.0
    %456 = vmatprep.subr.mxu0 0.0
    %457 = vmatpush1.msra.mxu0 0.0
    %458 = vmatprep.subr.mxu0 0.0
    %459 = vmatpush1.msra.mxu0 0.0
    %460 = vmatprep.subr.mxu0 0.0
    %461 = vmatpush1.msra.mxu0 0.0
    %462 = vmatprep.subr.mxu0 0.0
    %463 = vmatpush1.msra.mxu0 0.0
    %464 = vmatprep.subr.mxu0 0.0
    %465 = vmatpush1.msra.mxu0 0.0
    %466 = vmatprep.subr.mxu0 0.0
    %467 = vmatpush1.msra.mxu0 0.0
    %468 = vmatprep.subr.mxu0 0.0
    %469 = vmatpush1.msra.mxu0 0.0
    %470 = vmatprep.subr.mxu0 0.0
    %471 = vmatpush1.msra.mxu0 0.0
    %472 = vmatprep.subr.mxu0 0.0
    %473 = vmatpush1.msra.mxu0 0.0
    %474 = vmatprep.subr.mxu0 0.0
    %475 = vmatpush1.msra.mxu0 0.0
    %476 = vmatprep.subr.mxu0 0.0
    %477 = vmatpush1.msra.mxu0 0.0
    %478 = vmatprep.subr.mxu0 0.0
    %479 = vmatpush1.msra.mxu0 0.0
    %480 = vmatprep.subr.mxu0 0.0
    %481 = vmatpush1.msra.mxu0 0.0
    %482 = vmatprep.subr.mxu0 0.0
    %483 = vmatpush1.msra.mxu0 0.0
    %484 = vmatprep.subr.mxu0 0.0
    %485 = vmatpush1.msra.mxu0 0.0
    %486 = vmatprep.subr.mxu0 0.0
    %487 = vmatpush1.msra.mxu0 0.0
    %488 = vmatprep.subr.mxu0 0.0
    %489 = vmatpush1.msra.mxu0 0.0
    %490 = vmatprep.mubr.f32.mxu0 0.0
    %491 = vmatmul.mubr.f32.gmra.mrb[0].mxu0 %v318
    %v492 = vpop.f32.mrb[0].mxu0
    %v493 = vadd.f32 %v315, %v492
    %v494 = vpop.f32.mrb[0].mxu0
    %495 = vdwg.mxu0
    %s496 = scalar_lea.vmem [#allocation3], 4
    %497 = vst.msk [vmem:[%s496] sm:$0xf] %vm143, %v493
    %v498 = vsel %vm143, %v493, 0.0
    %499 = vadd.xlane.f32.xlu0 %v498
    %v500 = vpop.xlane.xlu0 %499
    %v501 = vadd.f32 %v397, %v500
    %v502 = vmul.f32 %v493, %v493
    %v503 = vsel %vm143, %v502, 0.0
    %504 = vadd.xlane.f32.xlu0 %v503
    %v505 = vpop.xlane.xlu0 %504
    %v506 = vadd.f32 %v402, %v505
    %v507 = vmul.f32 %v501, 0.03125
    %v508 = vmul.f32 %v506, 0.03125
    %v509 = vmul.f32 %v507, %v507
    %v510 = vsub.f32 %v508, %v509
    %v511 = vadd.f32 %v510, 1e-05
    %v512 = vrsqrt.pop %v511
    %v513 = vld [vmem:[%s7] sm:$0xf]
    %v514 = vmul.f32 %v513, %v512
    %v515 = vld [vmem:[%s8] sm:$0xf]
    %v516 = vmul.f32 %v514, %v507
    %v517 = vsub.f32 %v515, %v516
    %v518 = vld [vmem:[#allocation3] sm:$0xf]
    %v519 = vld [vmem:[#allocation3 + $0x4] sm:$0xf]
    %521 = vset.pattern.permute.xlu0 0
    %522 = vperm.xlu0 %521, %v514
    %v523 = vpop.permute.xlu0 %522
    %v525 = vmul.f32 %v518, %v523
    %v526 = vmul.f32 %v519, %v523
    %528 = vset.pattern.permute.xlu0 0
    %529 = vperm.xlu0 %528, %v517
    %v530 = vpop.permute.xlu0 %529
    %v532 = vadd.f32 %v525, %v530
    %v533 = vadd.f32 %v526, %v530
    %v534 = vld [vmem:[%s0] sm:$0xf]
    %v535 = vld [vmem:[%s0 + $0x4] sm:$0xf]
    %v536 = vadd.f32 %v532, %v534
    %v537 = vadd.f32 %v533, %v535
    %v538 = vmax.f32 %v536, 0.0
    %v539 = vmax.f32 %v537, 0.0
    %540 = vst.msk [vmem:[#allocation3] sm:$0xf] %vm143, %v538
    %541 = vst.msk [vmem:[#allocation3 + $0x4] sm:$0xf] %vm143, %v539
    // Predicated region
    $region38: #{basic_block_forward.1} parent=1 // pred_check
      _
    $region39: #{basic_block_forward.1} parent=1 // pred_check_branch
      %543 = sbr.rel (0) target = $region41
    $region40: #{basic_block_forward.1} parent=1 // pred_region
      %s545 = ssub.s32 128, 128
      %546 = vsyncadd [#allocation4], %s545
      %s547 = sshll.u32 [#allocation3], 4
      %s548 = int_to_ptr.vmem [resolvable:$true] %s547
      %553 = dma.vmem_to_hbm [thread:$0]  %s548, 128, %s9, [#allocation4], 64, 64, 4
    $region41: #{basic_block_forward.1} parent=1 // pred_fallthru
      _
    // Predicated region
    $region42: #{basic_block_forward.1} parent=1 // pred_check
      _
    $region43: #{basic_block_forward.1} parent=1 // pred_check_branch
      %555 = sbr.rel (0) target = $region45
    $region44: #{basic_block_forward.1} parent=1 // pred_region
      %556 = dma.done [#allocation4], 128
    $region45: #{basic_block_forward.1} parent=1 // pred_fallthru
      _
    %557 = vsyncpa [#allocation4], 1

</llo_original>
